<compile_context>
chip_gen: v6e
topology: v6e:2x2x1
jax: 0.10.0
libtpu: 0.0.40
codegen_flags: <defaults>
</compile_context>

<pallas_src>
import functools

import jax
import jax.numpy as jnp
from jax.experimental import pallas as pl
from jax.experimental.pallas import tpu as pltpu

EPS = 1e-5
LANE = 128
SUBLANE = 8
DEFAULT_N_TILE = 2048          # rows per tile; ~7-8 MiB VMEM resident -> safe on v7x


def _round_up(x, m):
    return (x + m - 1) // m * m


def _default_vmem_limit():
    # v5e/v6e: 128 MiB physical VMEM per core, v7x: 64 MiB.  Never request the whole part.
    try:
        cap = pltpu.get_tpu_info().vmem_capacity_bytes
    except Exception:
        cap = 128 * 1024 * 1024
    return int(min(cap // 2, 64 * 1024 * 1024))


# --------------------------------------------------------------------------------------
# Pass 1: per-feature sum / sum-of-squares over N tiles -> folded BN scale/shift.
# --------------------------------------------------------------------------------------
def _stats_kernel(x_ref, pk_ref, o_ref, s1_ref, s2_ref, *, cin, n_true):
    """x_ref: (nt, cin); pk_ref: (rows, F_PAD) packed params; o_ref: (8, F_PAD) scale/shift."""
    i = pl.program_id(0)

    @pl.when(i == 0)
    def _init():
        s1_ref[...] = jnp.zeros_like(s1_ref)
        s2_ref[...] = jnp.zeros_like(s2_ref)
        o_ref[...] = jnp.zeros_like(o_ref)

    x = x_ref[...].astype(jnp.float32)

    # Linear1 WITHOUT bias (b1 cancels in train-mode BN) as `cin` broadcast VPU FMAs.
    # Zero-padded rows (wrapper N padding) therefore contribute exactly 0 to both sums.
    u = x[:, 0:1] * pk_ref[0:1, :]
    for k in range(1, cin):
        u = u + x[:, k:k + 1] * pk_ref[k:k + 1, :]

    s1_ref[...] += jnp.sum(u, axis=0, keepdims=True)        # sum
    s2_ref[...] += jnp.sum(u * u, axis=0, keepdims=True)    # sum of squares

    @pl.when(i == pl.num_programs(0) - 1)
    def _finalize():
        inv_n = 1.0 / n_true                                 # divide by TRUE batch size
        mean = s1_ref[...] * inv_n
        var = jnp.maximum(s2_ref[...] * inv_n - mean * mean, 0.0)  # biased (train-mode) var
        gamma = pk_ref[cin:cin + 1, :]
        beta = pk_ref[cin + 1:cin + 2, :]
        scale = gamma * jax.lax.rsqrt(var + EPS)
        shift = beta - mean * scale
        o_ref[0:1, :] = scale
        o_ref[1:2, :] = shift


# --------------------------------------------------------------------------------------
# Pass 2: stream N tiles -> Linear1, fused BN (scale/shift) + ReLU, Linear2 on the MXU.
# --------------------------------------------------------------------------------------
def _apply_kernel(x_ref, pk_ref, st_ref, w2_ref, o_ref, *, cin, mxu_dtype):
    x = x_ref[...].astype(jnp.float32)

    u = x[:, 0:1] * pk_ref[0:1, :]
    for k in range(1, cin):
        u = u + x[:, k:k + 1] * pk_ref[k:k + 1, :]

    # BatchNorm + ReLU folded to one FMA + max.
    h = jnp.maximum(u * st_ref[0:1, :] + st_ref[1:2, :], 0.0)

    # Linear2 on the MXU; bf16 inputs (default) with f32 accumulation.
    out = jnp.dot(h.astype(mxu_dtype), w2_ref[...], preferred_element_type=jnp.float32)
    out = out + pk_ref[cin + 2:cin + 3, :]                   # + b2

    f_out = o_ref.shape[-1]
    o_ref[...] = out[:, :f_out].astype(o_ref.dtype)          # lane-pad dropped in-kernel


# --------------------------------------------------------------------------------------
# Factory: one-time parameter packing; returns jitted apply(xyz) -> (N, F).
# --------------------------------------------------------------------------------------
def make_position_embedding(params, *, mxu_dtype=jnp.bfloat16, n_tile=None,
                            out_dtype=jnp.float32):
    w1 = jnp.asarray(params["w1"], jnp.float32)       # torch Linear layout: (out, in)
    gamma = jnp.asarray(params["gamma"], jnp.float32)
    beta = jnp.asarray(params["beta"], jnp.float32)
    w2 = jnp.asarray(params["w2"], jnp.float32)
    b2 = jnp.asarray(params["b2"], jnp.float32)
    # params["b1"] is intentionally unused: a bias directly before train-mode BatchNorm
    # cancels exactly in the forward output (verified against the reference below).

    f, cin = w1.shape
    f_pad = _round_up(f, LANE)
    rows = _round_up(cin + 3, SUBLANE)

    # Packed parameter slab -> ONE small DMA.  Padding is zero, so padded lanes stay 0.
    packed = jnp.zeros((rows, f_pad), jnp.float32)
    packed = packed.at[:cin, :f].set(w1.T)            # rows [0:cin]  : w1 (in -> out)
    packed = packed.at[cin, :f].set(gamma)            # row  cin      : BN gamma
    packed = packed.at[cin + 1, :f].set(beta)         # row  cin + 1  : BN beta
    packed = packed.at[cin + 2, :f].set(b2)           # row  cin + 2  : b2

    w2_p = jnp.zeros((f_pad, f_pad), jnp.float32).at[:f, :f].set(w2.T).astype(mxu_dtype)

    vmem_limit = _default_vmem_limit()

    @jax.jit
    def apply(xyz):
        n = xyz.shape[0]
        nt = DEFAULT_N_TILE if n_tile is None else n_tile
        nt = max(SUBLANE, _round_up(min(nt, n), SUBLANE))
        n_pad = _round_up(n, nt)
        n_tiles = n_pad // nt

        x = xyz.astype(jnp.float32)
        if n_pad != n:
            # Zero rows contribute exactly 0 to the stats accumulators (no b1 in pass 1).
            x = jnp.pad(x, ((0, n_pad - n), (0, 0)))

        const2 = lambda shape: pl.BlockSpec(shape, lambda i: (0, 0))

        # ---- Pass 1: BN statistics (reduction over N tiles) -------------------------
        stats = pl.pallas_call(
            functools.partial(_stats_kernel, cin=cin, n_true=n),
            out_shape=jax.ShapeDtypeStruct((SUBLANE, f_pad), jnp.float32),
            grid_spec=pltpu.PrefetchScalarGridSpec(
                num_scalar_prefetch=0,
                grid=(n_tiles,),
                in_specs=[
                    pl.BlockSpec((nt, cin), lambda i: (i, 0)),   # xyz tile (raw, no pad)
                    const2((rows, f_pad)),                       # packed params
                ],
                out_specs=const2((SUBLANE, f_pad)),              # scale/shift slab
                scratch_shapes=[pltpu.VMEM((1, f_pad), jnp.float32),   # sum
                                pltpu.VMEM((1, f_pad), jnp.float32)],  # sum of squares
            ),
            compiler_params=pltpu.CompilerParams(
                dimension_semantics=("arbitrary",),              # accumulator axis
                vmem_limit_bytes=vmem_limit,
            ),
        )(x, packed)

        # ---- Pass 2: normalize + ReLU + Linear2, streamed over N tiles --------------
        out = pl.pallas_call(
            functools.partial(_apply_kernel, cin=cin, mxu_dtype=mxu_dtype),
            out_shape=jax.ShapeDtypeStruct((n_pad, f), out_dtype),
            grid_spec=pltpu.PrefetchScalarGridSpec(
                num_scalar_prefetch=0,
                grid=(n_tiles,),
                in_specs=[
                    pl.BlockSpec((nt, cin), lambda i: (i, 0)),   # xyz tile
                    const2((rows, f_pad)),                       # packed params
                    const2((SUBLANE, f_pad)),                    # scale/shift from pass 1
                    const2((f_pad, f_pad)),                      # w2 (bf16 by default)
                ],
                out_specs=pl.BlockSpec((nt, f), lambda i: (i, 0)),   # exact (N, F) write
            ),
            compiler_params=pltpu.CompilerParams(
                dimension_semantics=("parallel",),               # megacore-shardable (v7x)
                vmem_limit_bytes=vmem_limit,
            ),
        )(x, packed, stats, w2_p)

        return out if n_pad == n else out[:n]

    return apply


# --------------------------------------------------------------------------------------
# Plain-JAX reference mirroring the PyTorch forward (train-mode BN, includes b1).
# --------------------------------------------------------------------------------------
def _reference(xyz, params):
    h = xyz @ params["w1"].T + params["b1"]
    mean = jnp.mean(h, axis=0, keepdims=True)
    var = jnp.mean((h - mean) ** 2, axis=0, keepdims=True)
    h = (h - mean) / jnp.sqrt(var + EPS) * params["gamma"] + params["beta"]
    h = jnp.maximum(h, 0.0)
    return h @ params["w2"].T + params["b2"]


def init_params(key, input_channel, num_pos_feats):
    k1, k2, k3, k4 = jax.random.split(key, 4)
    s1 = 1.0 / (input_channel ** 0.5)
    s2 = 1.0 / (num_pos_feats ** 0.5)
    return {
        # nn.Linear weight layout: (out_features, in_features)
        "w1": jax.random.uniform(k1, (num_pos_feats, input_channel), jnp.float32, -s1, s1),
        "b1": jax.random.uniform(k2, (num_pos_feats,), jnp.float32, -s1, s1),
        "gamma": jnp.ones((num_pos_feats,), jnp.float32),    # BN weight
        "beta": jnp.zeros((num_pos_feats,), jnp.float32),    # BN bias
        "w2": jax.random.uniform(k3, (num_pos_feats, num_pos_feats), jnp.float32, -s2, s2),
        "b2": jax.random.uniform(k4, (num_pos_feats,), jnp.float32, -s2, s2),
    }


if __name__ == "__main__":
    key = jax.random.PRNGKey(0)
    k_x, k_p, k_x2 = jax.random.split(key, 3)

    N, CIN, F = 64, 3, 32            # small: 64 points, xyz coords, 32 pos feats
    xyz = jax.random.normal(k_x, (N, CIN), jnp.float32)
    params = init_params(k_p, CIN, F)
    ref = _reference(xyz, params)

    # 1) Exact-precision path (f32 MXU) -- tight tolerance, validates the fused structure,
    #    single-pass variance and the b1-cancellation fold.
    apply_f32 = make_position_embedding(params, mxu_dtype=jnp.float32)
    out_f32 = jax.block_until_ready(apply_f32(xyz))
    assert out_f32.shape == (N, F) and out_f32.dtype == jnp.float32
    assert jnp.allclose(out_f32, ref, atol=1e-4, rtol=1e-4), "f32 mismatch vs reference"

    # 2) Fast path: bf16 MXU inputs for Linear2 (f32 accumulation) -- bf16-level tolerance.
    apply_bf16 = make_position_embedding(params)
    out_bf16 = jax.block_until_ready(apply_bf16(xyz))
    assert out_bf16.shape == (N, F) and out_bf16.dtype == jnp.float32
    assert jnp.allclose(out_bf16, ref, atol=5e-2, rtol=5e-2), "bf16 mismatch vs reference"

    # 3) Multi-tile + ragged-N path: exercises the tiled two-pass BN pipeline
    #    (4 N-tiles of 64 rows, true N = 200, zero-row padding handled by the stats fold).
    N2 = 200
    xyz2 = jax.random.normal(k_x2, (N2, CIN), jnp.float32)
    ref2 = _reference(xyz2, params)
    apply_tiled = make_position_embedding(params, mxu_dtype=jnp.float32, n_tile=64)
    out2 = jax.block_until_ready(apply_tiled(xyz2))
    assert out2.shape == (N2, F)
    assert jnp.allclose(out2, ref2, atol=1e-4, rtol=1e-4), "tiled mismatch vs reference"

    print("KERNEL_OK")
</pallas_src>

<mosaic_0001>
module attributes {stable_mosaic.version = 11 : i64} {
  func.func @_apply_kernel(%arg0: i32, %arg1: memref<64x3xf32, #tpu.memory_space<vmem>>, %arg2: memref<8x128xf32, #tpu.memory_space<vmem>>, %arg3: memref<8x128xf32, #tpu.memory_space<vmem>>, %arg4: memref<128x128xf32, #tpu.memory_space<vmem>>, %arg5: memref<64x32xf32, #tpu.memory_space<vmem>>) attributes {dimension_semantics = [#tpu.dimension_semantics<parallel>], iteration_bounds = array<i64: 1>, scalar_prefetch = 0 : i64, scratch_operands = 0 : i64, tpu.core_type = #tpu.core_type<tc>, window_params = [{transform_indices = @transform_0, window_bounds = array<i64: 64, 3>}, {pipeline_mode = #tpu.pipeline_mode<synchronous>, transform_indices = @transform_1, window_bounds = array<i64: 8, 128>}, {pipeline_mode = #tpu.pipeline_mode<synchronous>, transform_indices = @transform_2, window_bounds = array<i64: 8, 128>}, {pipeline_mode = #tpu.pipeline_mode<synchronous>, transform_indices = @transform_3, window_bounds = array<i64: 128, 128>}, {transform_indices = @transform_4, window_bounds = array<i64: 64, 32>}]} {
    %c0 = arith.constant 0 : index
    %c0_0 = arith.constant 0 : index
    %0 = vector.load %arg1[%c0, %c0_0] : memref<64x3xf32, #tpu.memory_space<vmem>>, vector<64x3xf32>
    %1 = vector.extract_strided_slice %0 {offsets = [0, 0], sizes = [64, 1], strides = [1, 1]} : vector<64x3xf32> to vector<64x1xf32>
    %c0_1 = arith.constant 0 : index
    %c0_2 = arith.constant 0 : index
    %2 = vector.load %arg2[%c0_1, %c0_2] : memref<8x128xf32, #tpu.memory_space<vmem>>, vector<1x128xf32>
    %3 = vector.broadcast %1 : vector<64x1xf32> to vector<64x128xf32>
    %4 = vector.broadcast %2 : vector<1x128xf32> to vector<64x128xf32>
    %5 = arith.mulf %3, %4 : vector<64x128xf32>
    %6 = vector.extract_strided_slice %0 {offsets = [0, 1], sizes = [64, 1], strides = [1, 1]} : vector<64x3xf32> to vector<64x1xf32>
    %c1 = arith.constant 1 : index
    %c0_3 = arith.constant 0 : index
    %7 = vector.load %arg2[%c1, %c0_3] : memref<8x128xf32, #tpu.memory_space<vmem>>, vector<1x128xf32>
    %8 = vector.broadcast %6 : vector<64x1xf32> to vector<64x128xf32>
    %9 = vector.broadcast %7 : vector<1x128xf32> to vector<64x128xf32>
    %10 = arith.mulf %8, %9 : vector<64x128xf32>
    %11 = arith.addf %5, %10 : vector<64x128xf32>
    %12 = vector.extract_strided_slice %0 {offsets = [0, 2], sizes = [64, 1], strides = [1, 1]} : vector<64x3xf32> to vector<64x1xf32>
    %c2 = arith.constant 2 : index
    %c0_4 = arith.constant 0 : index
    %13 = vector.load %arg2[%c2, %c0_4] : memref<8x128xf32, #tpu.memory_space<vmem>>, vector<1x128xf32>
    %14 = vector.broadcast %12 : vector<64x1xf32> to vector<64x128xf32>
    %15 = vector.broadcast %13 : vector<1x128xf32> to vector<64x128xf32>
    %16 = arith.mulf %14, %15 : vector<64x128xf32>
    %17 = arith.addf %11, %16 : vector<64x128xf32>
    %c0_5 = arith.constant 0 : index
    %c0_6 = arith.constant 0 : index
    %18 = vector.load %arg3[%c0_5, %c0_6] : memref<8x128xf32, #tpu.memory_space<vmem>>, vector<1x128xf32>
    %19 = vector.broadcast %18 : vector<1x128xf32> to vector<64x128xf32>
    %20 = arith.mulf %17, %19 : vector<64x128xf32>
    %c1_7 = arith.constant 1 : index
    %c0_8 = arith.constant 0 : index
    %21 = vector.load %arg3[%c1_7, %c0_8] : memref<8x128xf32, #tpu.memory_space<vmem>>, vector<1x128xf32>
    %22 = vector.broadcast %21 : vector<1x128xf32> to vector<64x128xf32>
    %23 = arith.addf %20, %22 : vector<64x128xf32>
    %cst = arith.constant 0.000000e+00 : f32
    %24 = vector.broadcast %cst : f32 to vector<64x128xf32>
    %25 = arith.maximumf %23, %24 : vector<64x128xf32>
    %c0_9 = arith.constant 0 : index
    %c0_10 = arith.constant 0 : index
    %26 = vector.load %arg4[%c0_9, %c0_10] : memref<128x128xf32, #tpu.memory_space<vmem>>, vector<128x128xf32>
    %cst_11 = arith.constant dense<0.000000e+00> : vector<64x128xf32>
    %27 = tpu.matmul %25, %26, %cst_11 {dimension_numbers = #tpu.dot_dimension_numbers<[1], [0], [0], [1], [0, 0, 1, 1], [], []>} : vector<64x128xf32>, vector<128x128xf32>, vector<64x128xf32> -> vector<64x128xf32>
    %c5 = arith.constant 5 : index
    %c0_12 = arith.constant 0 : index
    %28 = vector.load %arg2[%c5, %c0_12] : memref<8x128xf32, #tpu.memory_space<vmem>>, vector<1x128xf32>
    %29 = vector.broadcast %28 : vector<1x128xf32> to vector<64x128xf32>
    %30 = arith.addf %27, %29 : vector<64x128xf32>
    %31 = vector.extract_strided_slice %30 {offsets = [0, 0], sizes = [64, 32], strides = [1, 1]} : vector<64x128xf32> to vector<64x32xf32>
    %c0_13 = arith.constant 0 : index
    %c0_14 = arith.constant 0 : index
    %32 = vector.load %arg5[%c0_13, %c0_14] : memref<64x32xf32, #tpu.memory_space<vmem>>, vector<64x32xf32>
    tpu.vector_store %arg5[%c0_13, %c0_14], %31 {strides = array<i32>} : memref<64x32xf32, #tpu.memory_space<vmem>>, vector<64x32xf32>,
    return
  }
  func.func @transform_0(%arg0: i32) -> (i32, i32) {
    %c0_i32 = arith.constant 0 : i32
    %c0_i32_0 = arith.constant 0 : i32
    return %arg0, %c0_i32 : i32, i32
  }
  func.func @transform_1(%arg0: i32) -> (i32, i32) {
    %c0_i32 = arith.constant 0 : i32
    %c0_i32_0 = arith.constant 0 : i32
    %c0_i32_1 = arith.constant 0 : i32
    return %c0_i32, %c0_i32_0 : i32, i32
  }
  func.func @transform_2(%arg0: i32) -> (i32, i32) {
    %c0_i32 = arith.constant 0 : i32
    %c0_i32_0 = arith.constant 0 : i32
    %c0_i32_1 = arith.constant 0 : i32
    return %c0_i32, %c0_i32_0 : i32, i32
  }
  func.func @transform_3(%arg0: i32) -> (i32, i32) {
    %c0_i32 = arith.constant 0 : i32
    %c0_i32_0 = arith.constant 0 : i32
    %c0_i32_1 = arith.constant 0 : i32
    return %c0_i32, %c0_i32_0 : i32, i32
  }
  func.func @transform_4(%arg0: i32) -> (i32, i32) {
    %c0_i32 = arith.constant 0 : i32
    %c0_i32_0 = arith.constant 0 : i32
    return %arg0, %c0_i32 : i32, i32
  }
}

module attributes {stable_mosaic.version = 11 : i64} {
  func.func @_stats_kernel(%arg0: i32, %arg1: memref<64x3xf32, #tpu.memory_space<vmem>>, %arg2: memref<8x128xf32, #tpu.memory_space<vmem>>, %arg3: memref<8x128xf32, #tpu.memory_space<vmem>>, %arg4: memref<1x128xf32, #tpu.memory_space<vmem>>, %arg5: memref<1x128xf32, #tpu.memory_space<vmem>>) attributes {dimension_semantics = [#tpu.dimension_semantics<arbitrary>], iteration_bounds = array<i64: 1>, scalar_prefetch = 0 : i64, scratch_operands = 2 : i64, tpu.core_type = #tpu.core_type<tc>, window_params = [{transform_indices = @transform_0, window_bounds = array<i64: 64, 3>}, {pipeline_mode = #tpu.pipeline_mode<synchronous>, transform_indices = @transform_1, window_bounds = array<i64: 8, 128>}, {pipeline_mode = #tpu.pipeline_mode<synchronous>, transform_indices = @transform_2, window_bounds = array<i64: 8, 128>}]} {
    %c0_i32 = arith.constant 0 : i32
    %0 = arith.cmpi eq, %arg0, %c0_i32 : i32
    %1 = arith.extui %0 : i1 to i32
    %c0_i32_0 = arith.constant 0 : i32
    %2 = arith.cmpi ne, %1, %c0_i32_0 : i32
    scf.if %2 {
      %cst_17 = arith.constant 0.000000e+00 : f32
      %35 = vector.broadcast %cst_17 : f32 to vector<1x128xf32>
      %c0_18 = arith.constant 0 : index
      %c0_19 = arith.constant 0 : index
      %36 = vector.load %arg4[%c0_18, %c0_19] : memref<1x128xf32, #tpu.memory_space<vmem>>, vector<1x128xf32>
      tpu.vector_store %arg4[%c0_18, %c0_19], %35 {strides = array<i32>} : memref<1x128xf32, #tpu.memory_space<vmem>>, vector<1x128xf32>,
      %cst_20 = arith.constant 0.000000e+00 : f32
      %37 = vector.broadcast %cst_20 : f32 to vector<1x128xf32>
      %c0_21 = arith.constant 0 : index
      %c0_22 = arith.constant 0 : index
      %38 = vector.load %arg5[%c0_21, %c0_22] : memref<1x128xf32, #tpu.memory_space<vmem>>, vector<1x128xf32>
      tpu.vector_store %arg5[%c0_21, %c0_22], %37 {strides = array<i32>} : memref<1x128xf32, #tpu.memory_space<vmem>>, vector<1x128xf32>,
      %cst_23 = arith.constant 0.000000e+00 : f32
      %39 = vector.broadcast %cst_23 : f32 to vector<8x128xf32>
      %c0_24 = arith.constant 0 : index
      %c0_25 = arith.constant 0 : index
      %40 = vector.load %arg3[%c0_24, %c0_25] : memref<8x128xf32, #tpu.memory_space<vmem>>, vector<8x128xf32>
      tpu.vector_store %arg3[%c0_24, %c0_25], %39 {strides = array<i32>} : memref<8x128xf32, #tpu.memory_space<vmem>>, vector<8x128xf32>,
    } else {
    }
    %c0 = arith.constant 0 : index
    %c0_1 = arith.constant 0 : index
    %3 = vector.load %arg1[%c0, %c0_1] : memref<64x3xf32, #tpu.memory_space<vmem>>, vector<64x3xf32>
    %4 = vector.extract_strided_slice %3 {offsets = [0, 0], sizes = [64, 1], strides = [1, 1]} : vector<64x3xf32> to vector<64x1xf32>
    %c0_2 = arith.constant 0 : index
    %c0_3 = arith.constant 0 : index
    %5 = vector.load %arg2[%c0_2, %c0_3] : memref<8x128xf32, #tpu.memory_space<vmem>>, vector<1x128xf32>
    %6 = vector.broadcast %4 : vector<64x1xf32> to vector<64x128xf32>
    %7 = vector.broadcast %5 : vector<1x128xf32> to vector<64x128xf32>
    %8 = arith.mulf %6, %7 : vector<64x128xf32>
    %9 = vector.extract_strided_slice %3 {offsets = [0, 1], sizes = [64, 1], strides = [1, 1]} : vector<64x3xf32> to vector<64x1xf32>
    %c1 = arith.constant 1 : index
    %c0_4 = arith.constant 0 : index
    %10 = vector.load %arg2[%c1, %c0_4] : memref<8x128xf32, #tpu.memory_space<vmem>>, vector<1x128xf32>
    %11 = vector.broadcast %9 : vector<64x1xf32> to vector<64x128xf32>
    %12 = vector.broadcast %10 : vector<1x128xf32> to vector<64x128xf32>
    %13 = arith.mulf %11, %12 : vector<64x128xf32>
    %14 = arith.addf %8, %13 : vector<64x128xf32>
    %15 = vector.extract_strided_slice %3 {offsets = [0, 2], sizes = [64, 1], strides = [1, 1]} : vector<64x3xf32> to vector<64x1xf32>
    %c2 = arith.constant 2 : index
    %c0_5 = arith.constant 0 : index
    %16 = vector.load %arg2[%c2, %c0_5] : memref<8x128xf32, #tpu.memory_space<vmem>>, vector<1x128xf32>
    %17 = vector.broadcast %15 : vector<64x1xf32> to vector<64x128xf32>
    %18 = vector.broadcast %16 : vector<1x128xf32> to vector<64x128xf32>
    %19 = arith.mulf %17, %18 : vector<64x128xf32>
    %20 = arith.addf %14, %19 : vector<64x128xf32>
    %c0_6 = arith.constant 0 : index
    %c0_7 = arith.constant 0 : index
    %21 = vector.load %arg4[%c0_6, %c0_7] : memref<1x128xf32, #tpu.memory_space<vmem>>, vector<1x128xf32>
    %cst = arith.constant dense<0.000000e+00> : vector<128xf32>
    %22 = vector.multi_reduction <add>, %20, %cst [0] : vector<64x128xf32> to vector<128xf32>
    %23 = vector.shape_cast %22 : vector<128xf32> to vector<1x128xf32>
    %24 = arith.addf %21, %23 : vector<1x128xf32>
    %c0_8 = arith.constant 0 : index
    %c0_9 = arith.constant 0 : index
    %25 = vector.load %arg4[%c0_8, %c0_9] : memref<1x128xf32, #tpu.memory_space<vmem>>, vector<1x128xf32>
    tpu.vector_store %arg4[%c0_8, %c0_9], %24 {strides = array<i32>} : memref<1x128xf32, #tpu.memory_space<vmem>>, vector<1x128xf32>,
    %c0_10 = arith.constant 0 : index
    %c0_11 = arith.constant 0 : index
    %26 = vector.load %arg5[%c0_10, %c0_11] : memref<1x128xf32, #tpu.memory_space<vmem>>, vector<1x128xf32>
    %27 = arith.mulf %20, %20 : vector<64x128xf32>
    %cst_12 = arith.constant dense<0.000000e+00> : vector<128xf32>
    %28 = vector.multi_reduction <add>, %27, %cst_12 [0] : vector<64x128xf32> to vector<128xf32>
    %29 = vector.shape_cast %28 : vector<128xf32> to vector<1x128xf32>
    %30 = arith.addf %26, %29 : vector<1x128xf32>
    %c0_13 = arith.constant 0 : index
    %c0_14 = arith.constant 0 : index
    %31 = vector.load %arg5[%c0_13, %c0_14] : memref<1x128xf32, #tpu.memory_space<vmem>>, vector<1x128xf32>
    tpu.vector_store %arg5[%c0_13, %c0_14], %30 {strides = array<i32>} : memref<1x128xf32, #tpu.memory_space<vmem>>, vector<1x128xf32>,
    %c0_i32_15 = arith.constant 0 : i32
    %32 = arith.cmpi eq, %arg0, %c0_i32_15 : i32
    %33 = arith.extui %32 : i1 to i32
    %c0_i32_16 = arith.constant 0 : i32
    %34 = arith.cmpi ne, %33, %c0_i32_16 : i32
    scf.if %34 {
      %c0_17 = arith.constant 0 : index
      %c0_18 = arith.constant 0 : index
      %35 = vector.load %arg4[%c0_17, %c0_18] : memref<1x128xf32, #tpu.memory_space<vmem>>, vector<1x128xf32>
      %cst_19 = arith.constant 1.562500e-02 : f32
      %36 = vector.broadcast %cst_19 : f32 to vector<1x128xf32>
      %37 = arith.mulf %35, %36 : vector<1x128xf32>
      %c0_20 = arith.constant 0 : index
      %c0_21 = arith.constant 0 : index
      %38 = vector.load %arg5[%c0_20, %c0_21] : memref<1x128xf32, #tpu.memory_space<vmem>>, vector<1x128xf32>
      %cst_22 = arith.constant 1.562500e-02 : f32
      %39 = vector.broadcast %cst_22 : f32 to vector<1x128xf32>
      %40 = arith.mulf %38, %39 : vector<1x128xf32>
      %41 = arith.mulf %37, %37 : vector<1x128xf32>
      %42 = arith.subf %40, %41 : vector<1x128xf32>
      %cst_23 = arith.constant 0.000000e+00 : f32
      %43 = vector.broadcast %cst_23 : f32 to vector<1x128xf32>
      %44 = arith.maximumf %42, %43 : vector<1x128xf32>
      %c3 = arith.constant 3 : index
      %c0_24 = arith.constant 0 : index
      %45 = vector.load %arg2[%c3, %c0_24] : memref<8x128xf32, #tpu.memory_space<vmem>>, vector<1x128xf32>
      %c4 = arith.constant 4 : index
      %c0_25 = arith.constant 0 : index
      %46 = vector.load %arg2[%c4, %c0_25] : memref<8x128xf32, #tpu.memory_space<vmem>>, vector<1x128xf32>
      %cst_26 = arith.constant 9.99999974E-6 : f32
      %47 = vector.broadcast %cst_26 : f32 to vector<1x128xf32>
      %48 = arith.addf %44, %47 : vector<1x128xf32>
      %49 = math.rsqrt %48 : vector<1x128xf32>
      %50 = arith.mulf %45, %49 : vector<1x128xf32>
      %51 = arith.mulf %37, %50 : vector<1x128xf32>
      %52 = arith.subf %46, %51 : vector<1x128xf32>
      %c0_27 = arith.constant 0 : index
      %c0_28 = arith.constant 0 : index
      %53 = vector.load %arg3[%c0_27, %c0_28] : memref<8x128xf32, #tpu.memory_space<vmem>>, vector<1x128xf32>
      tpu.vector_store %arg3[%c0_27, %c0_28], %50 {strides = array<i32>} : memref<8x128xf32, #tpu.memory_space<vmem>>, vector<1x128xf32>,
      %c1_29 = arith.constant 1 : index
      %c0_30 = arith.constant 0 : index
      %54 = vector.load %arg3[%c1_29, %c0_30] : memref<8x128xf32, #tpu.memory_space<vmem>>, vector<1x128xf32>
      tpu.vector_store %arg3[%c1_29, %c0_30], %52 {strides = array<i32>} : memref<8x128xf32, #tpu.memory_space<vmem>>, vector<1x128xf32>,
    } else {
    }
    return
  }
  func.func @transform_0(%arg0: i32) -> (i32, i32) {
    %c0_i32 = arith.constant 0 : i32
    %c0_i32_0 = arith.constant 0 : i32
    return %arg0, %c0_i32 : i32, i32
  }
  func.func @transform_1(%arg0: i32) -> (i32, i32) {
    %c0_i32 = arith.constant 0 : i32
    %c0_i32_0 = arith.constant 0 : i32
    %c0_i32_1 = arith.constant 0 : i32
    return %c0_i32, %c0_i32_0 : i32, i32
  }
  func.func @transform_2(%arg0: i32) -> (i32, i32) {
    %c0_i32 = arith.constant 0 : i32
    %c0_i32_0 = arith.constant 0 : i32
    %c0_i32_1 = arith.constant 0 : i32
    return %c0_i32, %c0_i32_0 : i32, i32
  }
}

</mosaic_0001>

<llo_original>
// kernel: apply.2
$region0: #{apply.2}
  #allocation0 [shape = 'u32[]', space=smem, size = 0x4, offset = 0x4, fixed_abs, tag = 'smem constant byte address 0x4 - core index']
  #allocation1 [shape = 'u32[144,128]{1,0:T(1,128)}', space=vmem, size = 0x12000, scoped, tag = 'internal scratch']
  #allocation2 [shape = 'f32[1,128]{1,0:T(1,128)}', space=vmem, size = 0x200, scoped, tag = 'scratch operand']
  #allocation3 [shape = 'f32[1,128]{1,0:T(1,128)}', space=vmem, size = 0x200, scoped, tag = 'scratch operand']
  %s0 = inlined_call_operand.vmem [shape: f32[64,3], index: 0, kind: input, shape index: {}]
  %s1 = inlined_call_operand.vmem [shape: f32[8,128], index: 1, kind: input, shape index: {}]
  %s2 = inlined_call_operand.vmem [shape: f32[8,128], index: 2, kind: output, shape index: {}]
  %s3 = sld [smem:[#allocation0]]
  $region26: #{apply.2} parent=0
    _
  %s5 = ssub.s32 1, %s3
  %s6 = scalar_select 0, %s5, %s3
  // Predicated region
  $region2: #{apply.2} parent=0 // pred_check
    _
  $region3: #{apply.2} parent=0 // pred_check_branch
    %8 = sbr.rel (0) target = $region5
  $region4: #{apply.2} parent=0 // pred_region
    _
  $region5: #{apply.2} parent=0 // pred_fallthru
    _
  // Predicated region
  $region6: #{apply.2} parent=0 // pred_check
    _
  $region7: #{apply.2} parent=0 // pred_check_branch
    %10 = sbr.rel (0) target = $region9
  $region8: #{apply.2} parent=0 // pred_region
    _
  $region9: #{apply.2} parent=0 // pred_fallthru
    _
  %p11 = scmp.eq.s32.totalorder 0, 0
  // Predicated region
  $region10: #{apply.2} parent=0 // pred_check
    %p12 = pneg %p11
  $region11: #{apply.2} parent=0 // pred_check_branch
    %14 = sbr.rel (%p12) target = $region13
  $region12: #{apply.2} parent=0 // pred_region
    %15 = vst [vmem:[#allocation2] sm:$0x1] 0.0
    %16 = vst [vmem:[#allocation3] sm:$0x1] 0.0
    %17 = vst [vmem:[%s2] sm:$0xff] 0.0
  $region13: #{apply.2} parent=0 // pred_fallthru
    _
  %v18 = vld [vmem:[%s0] sm:$0xff]
  %v19 = vld [vmem:[%s0 + $0x8] sm:$0xff]
  %v20 = vld [vmem:[%s0 + $0x10] sm:$0xff]
  %v21 = vld [vmem:[%s0 + $0x18] sm:$0xff]
  %v22 = vld [vmem:[%s0 + $0x20] sm:$0xff]
  %v23 = vld [vmem:[%s0 + $0x28] sm:$0xff]
  %v24 = vld [vmem:[%s0 + $0x30] sm:$0xff]
  %v25 = vld [vmem:[%s0 + $0x38] sm:$0xff]
  %v26 = vld [vmem:[%s1] sm:$0x1]
  %28 = vset.pattern.permute.xlu0 0
  %29 = vperm.xlu0 %28, %v18
  %v30 = vpop.permute.xlu0 %29
  %33 = vset.pattern.permute.xlu0 0
  %34 = vperm.xlu0 %33, %v19
  %v35 = vpop.permute.xlu0 %34
  %38 = vset.pattern.permute.xlu0 0
  %39 = vperm.xlu0 %38, %v20
  %v40 = vpop.permute.xlu0 %39
  %43 = vset.pattern.permute.xlu0 0
  %44 = vperm.xlu0 %43, %v21
  %v45 = vpop.permute.xlu0 %44
  %48 = vset.pattern.permute.xlu0 0
  %49 = vperm.xlu0 %48, %v22
  %v50 = vpop.permute.xlu0 %49
  %53 = vset.pattern.permute.xlu0 0
  %54 = vperm.xlu0 %53, %v23
  %v55 = vpop.permute.xlu0 %54
  %58 = vset.pattern.permute.xlu0 0
  %59 = vperm.xlu0 %58, %v24
  %v60 = vpop.permute.xlu0 %59
  %63 = vset.pattern.permute.xlu0 0
  %64 = vperm.xlu0 %63, %v25
  %v65 = vpop.permute.xlu0 %64
  %v67 = vlaneseq
  %v68 = vshrl.u32 %v67, 7
  %v69 = vsub.s32 0, %v68
  %v70 = vrot.slane %v26, %v69
  %v71 = vmul.f32 %v30, %v70
  %v72 = vmul.f32 %v35, %v70
  %v73 = vmul.f32 %v40, %v70
  %v74 = vmul.f32 %v45, %v70
  %v75 = vmul.f32 %v50, %v70
  %v76 = vmul.f32 %v55, %v70
  %v77 = vmul.f32 %v60, %v70
  %v78 = vmul.f32 %v65, %v70
  %v79 = vld [vmem:[%s1 + $0x1] sm:$0x1]
  %80 = vset.pattern.permute.xlu0 1
  %81 = vperm.xlu0 %80, %v18
  %v82 = vpop.permute.xlu0 %81
  %84 = vset.pattern.permute.xlu0 1
  %85 = vperm.xlu0 %84, %v19
  %v86 = vpop.permute.xlu0 %85
  %88 = vset.pattern.permute.xlu0 1
  %89 = vperm.xlu0 %88, %v20
  %v90 = vpop.permute.xlu0 %89
  %92 = vset.pattern.permute.xlu0 1
  %93 = vperm.xlu0 %92, %v21
  %v94 = vpop.permute.xlu0 %93
  %96 = vset.pattern.permute.xlu0 1
  %97 = vperm.xlu0 %96, %v22
  %v98 = vpop.permute.xlu0 %97
  %100 = vset.pattern.permute.xlu0 1
  %101 = vperm.xlu0 %100, %v23
  %v102 = vpop.permute.xlu0 %101
  %104 = vset.pattern.permute.xlu0 1
  %105 = vperm.xlu0 %104, %v24
  %v106 = vpop.permute.xlu0 %105
  %108 = vset.pattern.permute.xlu0 1
  %109 = vperm.xlu0 %108, %v25
  %v110 = vpop.permute.xlu0 %109
  %v112 = vlaneseq
  %v113 = vshrl.u32 %v112, 7
  %v114 = vsub.s32 0, %v113
  %v115 = vrot.slane %v79, %v114
  %v116 = vmul.f32 %v82, %v115
  %v117 = vmul.f32 %v86, %v115
  %v118 = vmul.f32 %v90, %v115
  %v119 = vmul.f32 %v94, %v115
  %v120 = vmul.f32 %v98, %v115
  %v121 = vmul.f32 %v102, %v115
  %v122 = vmul.f32 %v106, %v115
  %v123 = vmul.f32 %v110, %v115
  %v124 = vadd.f32 %v71, %v116
  %v125 = vadd.f32 %v72, %v117
  %v126 = vadd.f32 %v73, %v118
  %v127 = vadd.f32 %v74, %v119
  %v128 = vadd.f32 %v75, %v120
  %v129 = vadd.f32 %v76, %v121
  %v130 = vadd.f32 %v77, %v122
  %v131 = vadd.f32 %v78, %v123
  %v132 = vld [vmem:[%s1 + $0x2] sm:$0x1]
  %133 = vset.pattern.permute.xlu0 2
  %134 = vperm.xlu0 %133, %v18
  %v135 = vpop.permute.xlu0 %134
  %137 = vset.pattern.permute.xlu0 2
  %138 = vperm.xlu0 %137, %v19
  %v139 = vpop.permute.xlu0 %138
  %141 = vset.pattern.permute.xlu0 2
  %142 = vperm.xlu0 %141, %v20
  %v143 = vpop.permute.xlu0 %142
  %145 = vset.pattern.permute.xlu0 2
  %146 = vperm.xlu0 %145, %v21
  %v147 = vpop.permute.xlu0 %146
  %149 = vset.pattern.permute.xlu0 2
  %150 = vperm.xlu0 %149, %v22
  %v151 = vpop.permute.xlu0 %150
  %153 = vset.pattern.permute.xlu0 2
  %154 = vperm.xlu0 %153, %v23
  %v155 = vpop.permute.xlu0 %154
  %157 = vset.pattern.permute.xlu0 2
  %158 = vperm.xlu0 %157, %v24
  %v159 = vpop.permute.xlu0 %158
  %161 = vset.pattern.permute.xlu0 2
  %162 = vperm.xlu0 %161, %v25
  %v163 = vpop.permute.xlu0 %162
  %v165 = vlaneseq
  %v166 = vshrl.u32 %v165, 7
  %v167 = vsub.s32 0, %v166
  %v168 = vrot.slane %v132, %v167
  %v169 = vmul.f32 %v135, %v168
  %v170 = vmul.f32 %v139, %v168
  %v171 = vmul.f32 %v143, %v168
  %v172 = vmul.f32 %v147, %v168
  %v173 = vmul.f32 %v151, %v168
  %v174 = vmul.f32 %v155, %v168
  %v175 = vmul.f32 %v159, %v168
  %v176 = vmul.f32 %v163, %v168
  %v177 = vadd.f32 %v124, %v169
  %v178 = vadd.f32 %v125, %v170
  %v179 = vadd.f32 %v126, %v171
  %v180 = vadd.f32 %v127, %v172
  %v181 = vadd.f32 %v128, %v173
  %v182 = vadd.f32 %v129, %v174
  %v183 = vadd.f32 %v130, %v175
  %v184 = vadd.f32 %v131, %v176
  %v185 = vld [vmem:[#allocation2] sm:$0x1]
  %v186 = vadd.f32 %v177, %v178
  %v187 = vadd.f32 %v186, %v179
  %v188 = vadd.f32 %v187, %v180
  %v189 = vadd.f32 %v188, %v181
  %v190 = vadd.f32 %v189, %v182
  %v191 = vadd.f32 %v190, %v183
  %v192 = vadd.f32 %v191, %v184
  %v193 = vrot.slane %v192, 4
  %v194 = vadd.f32 %v192, %v193
  %v195 = vrot.slane %v194, 2
  %v196 = vadd.f32 %v194, %v195
  %v197 = vrot.slane %v196, 1
  %v198 = vadd.f32 %v196, %v197
  %v199 = vadd.f32 %v185, %v198
  %200 = vst [vmem:[#allocation2] sm:$0x1] %v199
  %v201 = vld [vmem:[#allocation3] sm:$0x1]
  %v202 = vmul.f32 %v177, %v177
  %v203 = vmul.f32 %v178, %v178
  %v204 = vmul.f32 %v179, %v179
  %v205 = vmul.f32 %v180, %v180
  %v206 = vmul.f32 %v181, %v181
  %v207 = vmul.f32 %v182, %v182
  %v208 = vmul.f32 %v183, %v183
  %v209 = vmul.f32 %v184, %v184
  %v210 = vadd.f32 %v202, %v203
  %v211 = vadd.f32 %v210, %v204
  %v212 = vadd.f32 %v211, %v205
  %v213 = vadd.f32 %v212, %v206
  %v214 = vadd.f32 %v213, %v207
  %v215 = vadd.f32 %v214, %v208
  %v216 = vadd.f32 %v215, %v209
  %v217 = vrot.slane %v216, 4
  %v218 = vadd.f32 %v216, %v217
  %v219 = vrot.slane %v218, 2
  %v220 = vadd.f32 %v218, %v219
  %v221 = vrot.slane %v220, 1
  %v222 = vadd.f32 %v220, %v221
  %v223 = vadd.f32 %v201, %v222
  %224 = vst [vmem:[#allocation3] sm:$0x1] %v223
  // Predicated region
  $region14: #{apply.2} parent=0 // pred_check
    %p225 = pneg %p11
  $region15: #{apply.2} parent=0 // pred_check_branch
    %227 = sbr.rel (%p225) target = $region17
  $region16: #{apply.2} parent=0 // pred_region
    %v228 = vld [vmem:[#allocation2] sm:$0x1]
    %v229 = vmul.f32 %v228, 0.015625
    %v230 = vld [vmem:[#allocation3] sm:$0x1]
    %v231 = vmul.f32 %v230, 0.015625
    %v232 = vmul.f32 %v229, %v229
    %v233 = vsub.f32 %v231, %v232
    %v234 = vmax.f32 %v233, 0.0
    %v235 = vld [vmem:[%s1 + $0x3] sm:$0x1]
    %v236 = vld [vmem:[%s1 + $0x4] sm:$0x1]
    %v237 = vadd.f32 %v234, 1e-05
    %v238 = vrsqrt.pop %v237
    %v239 = vmul.f32 %v235, %v238
    %v240 = vmul.f32 %v229, %v239
    %v241 = vsub.f32 %v236, %v240
    %242 = vst [vmem:[%s2] sm:$0x1] %v239
    %243 = vst [vmem:[%s2 + $0x1] sm:$0x1] %v241
  $region17: #{apply.2} parent=0 // pred_fallthru
    _
  // Predicated region
  $region18: #{apply.2} parent=0 // pred_check
    _
  $region19: #{apply.2} parent=0 // pred_check_branch
    %245 = sbr.rel (0) target = $region21
  $region20: #{apply.2} parent=0 // pred_region
    _
  $region21: #{apply.2} parent=0 // pred_fallthru
    _
  // Predicated region
  $region22: #{apply.2} parent=0 // pred_check
    _
  $region23: #{apply.2} parent=0 // pred_check_branch
    %247 = sbr.rel (0) target = $region25
  $region24: #{apply.2} parent=0 // pred_region
    _
  $region25: #{apply.2} parent=0 // pred_fallthru
    _

// kernel: apply.3
$region0: #{apply.3}
  #allocation0 [shape = 'u32[]', space=smem, size = 0x4, offset = 0x4, fixed_abs, tag = 'smem constant byte address 0x4 - core index']
  #allocation1 [shape = 'u32[144,128]{1,0:T(1,128)}', space=vmem, size = 0x12000, scoped, tag = 'internal scratch']
  %s0 = inlined_call_operand.vmem [shape: f32[64,3], index: 0, kind: input, shape index: {}]
  %s1 = inlined_call_operand.vmem [shape: f32[8,128], index: 1, kind: input, shape index: {}]
  %s2 = inlined_call_operand.vmem [shape: f32[8,128], index: 2, kind: input, shape index: {}]
  %s3 = inlined_call_operand.vmem [shape: f32[128,128], index: 3, kind: input, shape index: {}]
  %s4 = inlined_call_operand.vmem [shape: f32[64,32], index: 4, kind: output, shape index: {}]
  %s5 = sld [smem:[#allocation0]]
  $region26: #{apply.3} parent=0
    _
  %s7 = ssub.s32 1, %s5
  %s8 = scalar_select 0, %s7, %s5
  // Predicated region
  $region2: #{apply.3} parent=0 // pred_check
    _
  $region3: #{apply.3} parent=0 // pred_check_branch
    %10 = sbr.rel (0) target = $region5
  $region4: #{apply.3} parent=0 // pred_region
    _
  $region5: #{apply.3} parent=0 // pred_fallthru
    _
  // Predicated region
  $region6: #{apply.3} parent=0 // pred_check
    _
  $region7: #{apply.3} parent=0 // pred_check_branch
    %12 = sbr.rel (0) target = $region9
  $region8: #{apply.3} parent=0 // pred_region
    _
  $region9: #{apply.3} parent=0 // pred_fallthru
    _
  // Predicated region
  $region10: #{apply.3} parent=0 // pred_check
    _
  $region11: #{apply.3} parent=0 // pred_check_branch
    %14 = sbr.rel (0) target = $region13
  $region12: #{apply.3} parent=0 // pred_region
    _
  $region13: #{apply.3} parent=0 // pred_fallthru
    _
  // Predicated region
  $region14: #{apply.3} parent=0 // pred_check
    _
  $region15: #{apply.3} parent=0 // pred_check_branch
    %16 = sbr.rel (0) target = $region17
  $region16: #{apply.3} parent=0 // pred_region
    _
  $region17: #{apply.3} parent=0 // pred_fallthru
    _
  %v17 = vld [vmem:[%s0] sm:$0xff]
  %v18 = vld [vmem:[%s0 + $0x8] sm:$0xff]
  %v19 = vld [vmem:[%s0 + $0x10] sm:$0xff]
  %v20 = vld [vmem:[%s0 + $0x18] sm:$0xff]
  %v21 = vld [vmem:[%s0 + $0x20] sm:$0xff]
  %v22 = vld [vmem:[%s0 + $0x28] sm:$0xff]
  %v23 = vld [vmem:[%s0 + $0x30] sm:$0xff]
  %v24 = vld [vmem:[%s0 + $0x38] sm:$0xff]
  %v25 = vld [vmem:[%s1] sm:$0x1]
  %27 = vset.pattern.permute.xlu0 0
  %28 = vperm.xlu0 %27, %v17
  %v29 = vpop.permute.xlu0 %28
  %32 = vset.pattern.permute.xlu0 0
  %33 = vperm.xlu0 %32, %v18
  %v34 = vpop.permute.xlu0 %33
  %37 = vset.pattern.permute.xlu0 0
  %38 = vperm.xlu0 %37, %v19
  %v39 = vpop.permute.xlu0 %38
  %42 = vset.pattern.permute.xlu0 0
  %43 = vperm.xlu0 %42, %v20
  %v44 = vpop.permute.xlu0 %43
  %47 = vset.pattern.permute.xlu0 0
  %48 = vperm.xlu0 %47, %v21
  %v49 = vpop.permute.xlu0 %48
  %52 = vset.pattern.permute.xlu0 0
  %53 = vperm.xlu0 %52, %v22
  %v54 = vpop.permute.xlu0 %53
  %57 = vset.pattern.permute.xlu0 0
  %58 = vperm.xlu0 %57, %v23
  %v59 = vpop.permute.xlu0 %58
  %62 = vset.pattern.permute.xlu0 0
  %63 = vperm.xlu0 %62, %v24
  %v64 = vpop.permute.xlu0 %63
  %v66 = vlaneseq
  %v67 = vshrl.u32 %v66, 7
  %v68 = vsub.s32 0, %v67
  %v69 = vrot.slane %v25, %v68
  %v70 = vmul.f32 %v29, %v69
  %v71 = vmul.f32 %v34, %v69
  %v72 = vmul.f32 %v39, %v69
  %v73 = vmul.f32 %v44, %v69
  %v74 = vmul.f32 %v49, %v69
  %v75 = vmul.f32 %v54, %v69
  %v76 = vmul.f32 %v59, %v69
  %v77 = vmul.f32 %v64, %v69
  %v78 = vld [vmem:[%s1 + $0x1] sm:$0x1]
  %79 = vset.pattern.permute.xlu0 1
  %80 = vperm.xlu0 %79, %v17
  %v81 = vpop.permute.xlu0 %80
  %83 = vset.pattern.permute.xlu0 1
  %84 = vperm.xlu0 %83, %v18
  %v85 = vpop.permute.xlu0 %84
  %87 = vset.pattern.permute.xlu0 1
  %88 = vperm.xlu0 %87, %v19
  %v89 = vpop.permute.xlu0 %88
  %91 = vset.pattern.permute.xlu0 1
  %92 = vperm.xlu0 %91, %v20
  %v93 = vpop.permute.xlu0 %92
  %95 = vset.pattern.permute.xlu0 1
  %96 = vperm.xlu0 %95, %v21
  %v97 = vpop.permute.xlu0 %96
  %99 = vset.pattern.permute.xlu0 1
  %100 = vperm.xlu0 %99, %v22
  %v101 = vpop.permute.xlu0 %100
  %103 = vset.pattern.permute.xlu0 1
  %104 = vperm.xlu0 %103, %v23
  %v105 = vpop.permute.xlu0 %104
  %107 = vset.pattern.permute.xlu0 1
  %108 = vperm.xlu0 %107, %v24
  %v109 = vpop.permute.xlu0 %108
  %v111 = vlaneseq
  %v112 = vshrl.u32 %v111, 7
  %v113 = vsub.s32 0, %v112
  %v114 = vrot.slane %v78, %v113
  %v115 = vmul.f32 %v81, %v114
  %v116 = vmul.f32 %v85, %v114
  %v117 = vmul.f32 %v89, %v114
  %v118 = vmul.f32 %v93, %v114
  %v119 = vmul.f32 %v97, %v114
  %v120 = vmul.f32 %v101, %v114
  %v121 = vmul.f32 %v105, %v114
  %v122 = vmul.f32 %v109, %v114
  %v123 = vadd.f32 %v70, %v115
  %v124 = vadd.f32 %v71, %v116
  %v125 = vadd.f32 %v72, %v117
  %v126 = vadd.f32 %v73, %v118
  %v127 = vadd.f32 %v74, %v119
  %v128 = vadd.f32 %v75, %v120
  %v129 = vadd.f32 %v76, %v121
  %v130 = vadd.f32 %v77, %v122
  %v131 = vld [vmem:[%s1 + $0x2] sm:$0x1]
  %132 = vset.pattern.permute.xlu0 2
  %133 = vperm.xlu0 %132, %v17
  %v134 = vpop.permute.xlu0 %133
  %136 = vset.pattern.permute.xlu0 2
  %137 = vperm.xlu0 %136, %v18
  %v138 = vpop.permute.xlu0 %137
  %140 = vset.pattern.permute.xlu0 2
  %141 = vperm.xlu0 %140, %v19
  %v142 = vpop.permute.xlu0 %141
  %144 = vset.pattern.permute.xlu0 2
  %145 = vperm.xlu0 %144, %v20
  %v146 = vpop.permute.xlu0 %145
  %148 = vset.pattern.permute.xlu0 2
  %149 = vperm.xlu0 %148, %v21
  %v150 = vpop.permute.xlu0 %149
  %152 = vset.pattern.permute.xlu0 2
  %153 = vperm.xlu0 %152, %v22
  %v154 = vpop.permute.xlu0 %153
  %156 = vset.pattern.permute.xlu0 2
  %157 = vperm.xlu0 %156, %v23
  %v158 = vpop.permute.xlu0 %157
  %160 = vset.pattern.permute.xlu0 2
  %161 = vperm.xlu0 %160, %v24
  %v162 = vpop.permute.xlu0 %161
  %v164 = vlaneseq
  %v165 = vshrl.u32 %v164, 7
  %v166 = vsub.s32 0, %v165
  %v167 = vrot.slane %v131, %v166
  %v168 = vmul.f32 %v134, %v167
  %v169 = vmul.f32 %v138, %v167
  %v170 = vmul.f32 %v142, %v167
  %v171 = vmul.f32 %v146, %v167
  %v172 = vmul.f32 %v150, %v167
  %v173 = vmul.f32 %v154, %v167
  %v174 = vmul.f32 %v158, %v167
  %v175 = vmul.f32 %v162, %v167
  %v176 = vadd.f32 %v123, %v168
  %v177 = vadd.f32 %v124, %v169
  %v178 = vadd.f32 %v125, %v170
  %v179 = vadd.f32 %v126, %v171
  %v180 = vadd.f32 %v127, %v172
  %v181 = vadd.f32 %v128, %v173
  %v182 = vadd.f32 %v129, %v174
  %v183 = vadd.f32 %v130, %v175
  %v184 = vld [vmem:[%s2] sm:$0x1]
  %v185 = vlaneseq
  %v186 = vshrl.u32 %v185, 7
  %v187 = vsub.s32 0, %v186
  %v188 = vrot.slane %v184, %v187
  %v189 = vmul.f32 %v176, %v188
  %v190 = vmul.f32 %v177, %v188
  %v191 = vmul.f32 %v178, %v188
  %v192 = vmul.f32 %v179, %v188
  %v193 = vmul.f32 %v180, %v188
  %v194 = vmul.f32 %v181, %v188
  %v195 = vmul.f32 %v182, %v188
  %v196 = vmul.f32 %v183, %v188
  %v197 = vld [vmem:[%s2 + $0x1] sm:$0x1]
  %v198 = vlaneseq
  %v199 = vshrl.u32 %v198, 7
  %v200 = vsub.s32 0, %v199
  %v201 = vrot.slane %v197, %v200
  %v202 = vadd.f32 %v189, %v201
  %v203 = vadd.f32 %v190, %v201
  %v204 = vadd.f32 %v191, %v201
  %v205 = vadd.f32 %v192, %v201
  %v206 = vadd.f32 %v193, %v201
  %v207 = vadd.f32 %v194, %v201
  %v208 = vadd.f32 %v195, %v201
  %v209 = vadd.f32 %v196, %v201
  %v210 = vmax.f32 %v202, 0.0
  %v211 = vmax.f32 %v203, 0.0
  %v212 = vmax.f32 %v204, 0.0
  %v213 = vmax.f32 %v205, 0.0
  %v214 = vmax.f32 %v206, 0.0
  %v215 = vmax.f32 %v207, 0.0
  %v216 = vmax.f32 %v208, 0.0
  %v217 = vmax.f32 %v209, 0.0
  %v218 = vld [vmem:[%s3] sm:$0xff]
  %v219 = vld [vmem:[%s3 + $0x8] sm:$0xff]
  %v220 = vld [vmem:[%s3 + $0x10] sm:$0xff]
  %v221 = vld [vmem:[%s3 + $0x18] sm:$0xff]
  %v222 = vld [vmem:[%s3 + $0x20] sm:$0xff]
  %v223 = vld [vmem:[%s3 + $0x28] sm:$0xff]
  %v224 = vld [vmem:[%s3 + $0x30] sm:$0xff]
  %v225 = vld [vmem:[%s3 + $0x38] sm:$0xff]
  %v226 = vld [vmem:[%s3 + $0x40] sm:$0xff]
  %v227 = vld [vmem:[%s3 + $0x48] sm:$0xff]
  %v228 = vld [vmem:[%s3 + $0x50] sm:$0xff]
  %v229 = vld [vmem:[%s3 + $0x58] sm:$0xff]
  %v230 = vld [vmem:[%s3 + $0x60] sm:$0xff]
  %v231 = vld [vmem:[%s3 + $0x68] sm:$0xff]
  %v232 = vld [vmem:[%s3 + $0x70] sm:$0xff]
  %v233 = vld [vmem:[%s3 + $0x78] sm:$0xff]
  %v234 = vld [vmem:[%s1 + $0x5] sm:$0x1]
  %v235 = vlaneseq
  %v236 = vshrl.u32 %v235, 7
  %v237 = vsub.s32 0, %v236
  %v238 = vrot.slane %v234, %v237
  %239 = vmatprep.subr.mxu0 0.0
  %240 = vmatpush1.msra.mxu0 %v233
  %241 = vmatprep.subr.mxu0 0.0
  %242 = vmatpush1.msra.mxu0 %v232
  %243 = vmatprep.subr.mxu0 0.0
  %244 = vmatpush1.msra.mxu0 %v231
  %245 = vmatprep.subr.mxu0 0.0
  %246 = vmatpush1.msra.mxu0 %v230
  %247 = vmatprep.subr.mxu0 0.0
  %248 = vmatpush1.msra.mxu0 %v229
  %249 = vmatprep.subr.mxu0 0.0
  %250 = vmatpush1.msra.mxu0 %v228
  %251 = vmatprep.subr.mxu0 0.0
  %252 = vmatpush1.msra.mxu0 %v227
  %253 = vmatprep.subr.mxu0 0.0
  %254 = vmatpush1.msra.mxu0 %v226
  %255 = vmatprep.subr.mxu0 0.0
  %256 = vmatpush1.msra.mxu0 %v225
  %257 = vmatprep.subr.mxu0 0.0
  %258 = vmatpush1.msra.mxu0 %v224
  %259 = vmatprep.subr.mxu0 0.0
  %260 = vmatpush1.msra.mxu0 %v223
  %261 = vmatprep.subr.mxu0 0.0
  %262 = vmatpush1.msra.mxu0 %v222
  %263 = vmatprep.subr.mxu0 0.0
  %264 = vmatpush1.msra.mxu0 %v221
  %265 = vmatprep.subr.mxu0 0.0
  %266 = vmatpush1.msra.mxu0 %v220
  %267 = vmatprep.subr.mxu0 0.0
  %268 = vmatpush1.msra.mxu0 %v219
  %269 = vmatprep.subr.mxu0 0.0
  %270 = vmatpush1.msra.mxu0 %v218
  %271 = vmatprep.subr.mxu0 0.0
  %272 = vmatpush2.msra.mxu0 0.0
  %273 = vmatprep.subr.mxu0 0.0
  %274 = vmatpush2.msra.mxu0 0.0
  %275 = vmatprep.subr.mxu0 0.0
  %276 = vmatpush2.msra.mxu0 0.0
  %277 = vmatprep.subr.mxu0 0.0
  %278 = vmatpush2.msra.mxu0 0.0
  %279 = vmatprep.subr.mxu0 0.0
  %280 = vmatpush2.msra.mxu0 0.0
  %281 = vmatprep.subr.mxu0 0.0
  %282 = vmatpush2.msra.mxu0 0.0
  %283 = vmatprep.subr.mxu0 0.0
  %284 = vmatpush2.msra.mxu0 0.0
  %285 = vmatprep.subr.mxu0 0.0
  %286 = vmatpush2.msra.mxu0 0.0
  %287 = vmatprep.subr.mxu0 0.0
  %288 = vmatpush2.msra.mxu0 0.0
  %289 = vmatprep.subr.mxu0 0.0
  %290 = vmatpush2.msra.mxu0 0.0
  %291 = vmatprep.subr.mxu0 0.0
  %292 = vmatpush2.msra.mxu0 0.0
  %293 = vmatprep.subr.mxu0 0.0
  %294 = vmatpush2.msra.mxu0 0.0
  %295 = vmatprep.subr.mxu0 0.0
  %296 = vmatpush2.msra.mxu0 0.0
  %297 = vmatprep.subr.mxu0 0.0
  %298 = vmatpush2.msra.mxu0 0.0
  %299 = vmatprep.subr.mxu0 0.0
  %300 = vmatpush2.msra.mxu0 0.0
  %301 = vmatprep.subr.mxu0 0.0
  %302 = vmatpush2.msra.mxu0 0.0
  %303 = vmatprep.mubr.f32.mxu0 0.0
  %304 = vmatmul.mubr.f32.gmra.mxu0 %v210
  %v305 = vpop.f32.mrf.mxu0
  %v306 = vadd.f32 %v238, %v305
  %v307 = vpop.f32.mrf.mxu0
  %308 = vmatprep.mubr.f32.mxu0 0.0
  %309 = vmatmul.mubr.f32.gmra.mxu0 %v211
  %v310 = vpop.f32.mrf.mxu0
  %v311 = vadd.f32 %v238, %v310
  %v312 = vpop.f32.mrf.mxu0
  %313 = vmatprep.mubr.f32.mxu0 0.0
  %314 = vmatmul.mubr.f32.gmra.mxu0 %v212
  %v315 = vpop.f32.mrf.mxu0
  %v316 = vadd.f32 %v238, %v315
  %v317 = vpop.f32.mrf.mxu0
  %318 = vmatprep.mubr.f32.mxu0 0.0
  %319 = vmatmul.mubr.f32.gmra.mxu0 %v213
  %v320 = vpop.f32.mrf.mxu0
  %v321 = vadd.f32 %v238, %v320
  %v322 = vpop.f32.mrf.mxu0
  %323 = vmatprep.mubr.f32.mxu0 0.0
  %324 = vmatmul.mubr.f32.gmra.mxu0 %v214
  %v325 = vpop.f32.mrf.mxu0
  %v326 = vadd.f32 %v238, %v325
  %v327 = vpop.f32.mrf.mxu0
  %328 = vmatprep.mubr.f32.mxu0 0.0
  %329 = vmatmul.mubr.f32.gmra.mxu0 %v215
  %v330 = vpop.f32.mrf.mxu0
  %v331 = vadd.f32 %v238, %v330
  %v332 = vpop.f32.mrf.mxu0
  %333 = vmatprep.mubr.f32.mxu0 0.0
  %334 = vmatmul.mubr.f32.gmra.mxu0 %v216
  %v335 = vpop.f32.mrf.mxu0
  %v336 = vadd.f32 %v238, %v335
  %v337 = vpop.f32.mrf.mxu0
  %338 = vmatprep.mubr.f32.mxu0 0.0
  %339 = vmatmul.mubr.f32.gmra.mxu0 %v217
  %v340 = vpop.f32.mrf.mxu0
  %v341 = vadd.f32 %v238, %v340
  %v342 = vpop.f32.mrf.mxu0
  %343 = vdwg.mxu0
  %vm344 = vcmask 261120
  %345 = vst.msk [vmem:[%s4] sm:$0xff] %vm344, %v306
  %346 = vst.msk [vmem:[%s4 + $0x8] sm:$0xff] %vm344, %v311
  %347 = vst.msk [vmem:[%s4 + $0x10] sm:$0xff] %vm344, %v316
  %348 = vst.msk [vmem:[%s4 + $0x18] sm:$0xff] %vm344, %v321
  %349 = vst.msk [vmem:[%s4 + $0x20] sm:$0xff] %vm344, %v326
  %350 = vst.msk [vmem:[%s4 + $0x28] sm:$0xff] %vm344, %v331
  %351 = vst.msk [vmem:[%s4 + $0x30] sm:$0xff] %vm344, %v336
  %352 = vst.msk [vmem:[%s4 + $0x38] sm:$0xff] %vm344, %v341
  // Predicated region
  $region18: #{apply.3} parent=0 // pred_check
    _
  $region19: #{apply.3} parent=0 // pred_check_branch
    %354 = sbr.rel (0) target = $region21
  $region20: #{apply.3} parent=0 // pred_region
    _
  $region21: #{apply.3} parent=0 // pred_fallthru
    _
  // Predicated region
  $region22: #{apply.3} parent=0 // pred_check
    _
  $region23: #{apply.3} parent=0 // pred_check_branch
    %356 = sbr.rel (0) target = $region25
  $region24: #{apply.3} parent=0 // pred_region
    _
  $region25: #{apply.3} parent=0 // pred_fallthru
    _

</llo_original>
